<compile_context>
chip_gen: v5e
topology: v5e:2x2
jax: 0.10.0
libtpu: 0.0.40
codegen_flags: <defaults>
</compile_context>

<pallas_src>
import numpy as np
import jax
import jax.numpy as jnp
from jax.experimental import pallas as pl
from jax.experimental.pallas import tpu as pltpu


def _gather_kernel(x_ref, perm_ref, o_ref):
    # x_ref:    (B, N)    VMEM (full x, resident across all K tiles)
    # perm_ref: (1, TK)   VMEM int32 column indices for this K tile (-1 = pad)
    # o_ref:    (B, TK)   VMEM output tile (lane-dense, TK % 128 == 0)
    n = x_ref.shape[1]
    tk = o_ref.shape[1]

    # sel[n, k] = 1.0 iff perm[k] == n  (padded perm entries are -1 -> all-zero col)
    row_ids = jax.lax.broadcasted_iota(jnp.int32, (n, tk), 0)
    sel = (row_ids == perm_ref[0][None, :]).astype(x_ref.dtype)

    o_ref[...] = jax.lax.dot_general(
        x_ref[...],
        sel,
        dimension_numbers=(((1,), (0,)), ((), ())),
        precision=jax.lax.Precision.HIGHEST,       # keep f32 gather bit-exact
        preferred_element_type=jnp.float32,
    ).astype(o_ref.dtype)


def random_sampler(x, perm, *, tk=None):
    """x: (B, N); perm: (K,) int32 sorted kept-feature indices. Returns (B, K)."""
    B, N = x.shape
    K = int(perm.shape[0])

    # Pad the output/lane axis to a multiple of 128 for unmasked full-width stores.
    K_pad = max(128, ((K + 127) // 128) * 128)
    if tk is None:
        tk = K_pad
        for cand in (512, 384, 256, 128):
            if K_pad % cand == 0:
                tk = cand
                break
    assert K_pad % tk == 0 and tk % 128 == 0

    # Padded index vector; -1 never matches a valid feature id -> zero columns.
    perm_p = jnp.full((1, K_pad), -1, dtype=jnp.int32)
    perm_p = perm_p.at[0, :K].set(perm.astype(jnp.int32))

    itemsize = jnp.dtype(x.dtype).itemsize
    cost = pl.CostEstimate(
        flops=2 * B * N * K_pad,
        transcendentals=0,
        bytes_accessed=B * N * itemsize + K_pad * 4 + B * K_pad * itemsize,
    )

    out_p = pl.pallas_call(
        _gather_kernel,
        out_shape=jax.ShapeDtypeStruct((B, K_pad), x.dtype),
        grid_spec=pltpu.PrefetchScalarGridSpec(
            num_scalar_prefetch=0,
            grid=(K_pad // tk,),
            in_specs=[
                pl.BlockSpec((B, N), lambda j: (0, 0)),    # full x, resident
                pl.BlockSpec((1, tk), lambda j: (0, j)),   # per-tile indices
            ],
            out_specs=pl.BlockSpec((B, tk), lambda j: (0, j)),
        ),
        compiler_params=pltpu.CompilerParams(
            dimension_semantics=("parallel",),             # K tiles independent
        ),
        cost_estimate=cost,
    )(x, perm_p)

    return out_p[:, :K]


def make_random_perm(key, total, remove):
    """Mirror torch.randperm(N)[:N-R].sort().values deterministically."""
    K = total - remove
    p = jax.random.permutation(key, total)[:K]
    return jnp.sort(p).astype(jnp.int32)


if __name__ == "__main__":
    # Module config: total=N features, remove=R, keep K=N-R.
    total, remove = 32, 8
    K = total - remove
    B = 8

    root = jax.random.PRNGKey(0)
    k_x, k_perm = jax.random.split(root)

    x = jax.random.normal(k_x, (B, total), dtype=jnp.float32)
    perm = make_random_perm(k_perm, total, remove)          # fixed "parameter"

    out = random_sampler(x, perm)
    out = jax.block_until_ready(out)

    # Reference: out[b, k] = x[b, perm[k]]
    ref = jnp.take(x, perm, axis=1)

    assert out.shape == (B, K), out.shape
    np.testing.assert_allclose(np.asarray(out), np.asarray(ref), rtol=0, atol=0)

    print("KERNEL_OK")
</pallas_src>

<mosaic_0001>
module attributes {stable_mosaic.version = 11 : i64} {
  func.func @_gather_kernel(%arg0: i32, %arg1: memref<8x32xf32, #tpu.memory_space<vmem>>, %arg2: memref<1x128xi32, #tpu.memory_space<vmem>>, %arg3: memref<8x128xf32, #tpu.memory_space<vmem>>) attributes {dimension_semantics = [#tpu.dimension_semantics<parallel>], iteration_bounds = array<i64: 1>, scalar_prefetch = 0 : i64, scratch_operands = 0 : i64, tpu.core_type = #tpu.core_type<tc>, window_params = [{pipeline_mode = #tpu.pipeline_mode<synchronous>, transform_indices = @transform_0, window_bounds = array<i64: 8, 32>}, {transform_indices = @transform_1, window_bounds = array<i64: 1, 128>}, {transform_indices = @transform_2, window_bounds = array<i64: 8, 128>}]} {
    %0 = tpu.iota {dimensions = array<i32: 0>} : vector<32x128xi32>
    %c0 = arith.constant 0 : index
    %c0_0 = arith.constant 0 : index
    %1 = vector.load %arg2[%c0, %c0_0] : memref<1x128xi32, #tpu.memory_space<vmem>>, vector<1x128xi32>
    %2 = vector.shape_cast %1 : vector<1x128xi32> to vector<128xi32>
    %3 = vector.shape_cast %2 : vector<128xi32> to vector<1x128xi32>
    %4 = vector.broadcast %3 : vector<1x128xi32> to vector<32x128xi32>
    %5 = arith.cmpi eq, %0, %4 : vector<32x128xi32>
    %6 = arith.extui %5 : vector<32x128xi1> to vector<32x128xi32>
    %7 = arith.sitofp %6 : vector<32x128xi32> to vector<32x128xf32>
    %c0_1 = arith.constant 0 : index
    %c0_2 = arith.constant 0 : index
    %8 = vector.load %arg1[%c0_1, %c0_2] : memref<8x32xf32, #tpu.memory_space<vmem>>, vector<8x32xf32>
    %cst = arith.constant dense<0.000000e+00> : vector<8x128xf32>
    %9 = tpu.matmul %8, %7, %cst {dimension_numbers = #tpu.dot_dimension_numbers<[1], [0], [0], [1], [0, 0, 1, 1], [], []>, precision = #tpu.contract_precision<fp32>} : vector<8x32xf32>, vector<32x128xf32>, vector<8x128xf32> -> vector<8x128xf32>
    %c0_3 = arith.constant 0 : index
    %c0_4 = arith.constant 0 : index
    %10 = vector.load %arg3[%c0_3, %c0_4] : memref<8x128xf32, #tpu.memory_space<vmem>>, vector<8x128xf32>
    tpu.vector_store %arg3[%c0_3, %c0_4], %9 {strides = array<i32>} : memref<8x128xf32, #tpu.memory_space<vmem>>, vector<8x128xf32>,
    return
  }
  func.func @transform_0(%arg0: i32) -> (i32, i32) {
    %c0_i32 = arith.constant 0 : i32
    %c0_i32_0 = arith.constant 0 : i32
    %c0_i32_1 = arith.constant 0 : i32
    return %c0_i32, %c0_i32_0 : i32, i32
  }
  func.func @transform_1(%arg0: i32) -> (i32, i32) {
    %c0_i32 = arith.constant 0 : i32
    %c0_i32_0 = arith.constant 0 : i32
    return %c0_i32, %arg0 : i32, i32
  }
  func.func @transform_2(%arg0: i32) -> (i32, i32) {
    %c0_i32 = arith.constant 0 : i32
    %c0_i32_0 = arith.constant 0 : i32
    return %c0_i32, %arg0 : i32, i32
  }
}

</mosaic_0001>

<llo_original>
// kernel: tpu_custom_call.1
$region0: #{tpu_custom_call.1}
  #allocation0 [shape = 'u32[]', space=smem, size = 0x4, offset = 0x4, fixed_abs, tag = 'smem constant byte address 0x4 - core index']
  #allocation1 [shape = 'u32[72,128]{1,0:T(1,128)}', space=vmem, size = 0x9000, scoped, tag = 'internal scratch']
  %s0 = inlined_call_operand.hbm [shape: f32[8,32], index: 0, kind: input, shape index: {}]
  %s1 = inlined_call_operand.hbm [shape: s32[1,128], index: 1, kind: input, shape index: {}]
  %s2 = inlined_call_operand.hbm [shape: f32[8,128], index: 2, kind: output, shape index: {}]
  %s3 = sld [smem:[#allocation0]]
  $region26: #{tpu_custom_call.1} parent=0
    _
  %s5 = ssub.s32 1, %s3
  %s6 = scalar_select 0, %s5, %s3
  $region1: #{tpu_custom_call.1} parent=0
    #allocation2 [shape = 'u8[4096]{0}', space=vmem, size = 0x1000, scoped, tag = 'input window, operand 0, single buffered']
    #allocation3 [shape = 's32[1]{0}', space=sflag, size = 0x4, scoped, tag = 'scoped memory for tpu_custom_call.1']
    #allocation4 [shape = 's32[1]{0}', space=sflag, size = 0x4, scoped, tag = 'scoped memory for tpu_custom_call.1']
    #allocation5 [shape = 'u8[512]{0}', space=vmem, size = 0x400, scoped, tag = 'input window, operand 1, single buffered']
    #allocation6 [shape = 's32[1]{0}', space=sflag, size = 0x4, scoped, tag = 'scoped memory for tpu_custom_call.1']
    #allocation7 [shape = 'u8[4096]{0}', space=vmem, size = 0x1000, scoped, tag = 'output window, operand 0, single buffered']
    %7 = vsyncpa [#allocation3], 0
    %8 = vsyncpa [#allocation6], 0
    %9 = vsyncpa [#allocation4], 0
    // Predicated region
    $region2: #{tpu_custom_call.1} parent=1 // pred_check
      _
    $region3: #{tpu_custom_call.1} parent=1 // pred_check_branch
      %11 = sbr.rel (0) target = $region5
    $region4: #{tpu_custom_call.1} parent=1 // pred_region
      %13 = vsyncadd [#allocation3], 0
      %s15 = sshll.u32 %s0, 4
      %s16 = int_to_ptr.hbm [resolvable:$true] %s15
      %s17 = sshll.u32 [#allocation2], 4
      %s18 = int_to_ptr.vmem [resolvable:$true] %s17
      %20 = dma.hbm_to_vmem [thread:$0]  %s16, 128, %s18, [#allocation3]
    $region5: #{tpu_custom_call.1} parent=1 // pred_fallthru
      _
    // Predicated region
    $region6: #{tpu_custom_call.1} parent=1 // pred_check
      _
    $region7: #{tpu_custom_call.1} parent=1 // pred_check_branch
      %22 = sbr.rel (0) target = $region9
    $region8: #{tpu_custom_call.1} parent=1 // pred_region
      %24 = vsyncadd [#allocation6], 0
      %s26 = sshll.u32 %s1, 4
      %s27 = int_to_ptr.hbm [resolvable:$true] %s26
      %s28 = sshll.u32 [#allocation5], 4
      %s29 = int_to_ptr.vmem [resolvable:$true] %s28
      %31 = dma.hbm_to_vmem [thread:$0]  %s27, 16, %s29, [#allocation6]
    $region9: #{tpu_custom_call.1} parent=1 // pred_fallthru
      _
    // Predicated region
    $region10: #{tpu_custom_call.1} parent=1 // pred_check
      _
    $region11: #{tpu_custom_call.1} parent=1 // pred_check_branch
      %33 = sbr.rel (0) target = $region13
    $region12: #{tpu_custom_call.1} parent=1 // pred_region
      %35 = dma.done [#allocation3], 128
    $region13: #{tpu_custom_call.1} parent=1 // pred_fallthru
      _
    // Predicated region
    $region14: #{tpu_custom_call.1} parent=1 // pred_check
      _
    $region15: #{tpu_custom_call.1} parent=1 // pred_check_branch
      %37 = sbr.rel (0) target = $region17
    $region16: #{tpu_custom_call.1} parent=1 // pred_region
      %39 = dma.done [#allocation6], 16
    $region17: #{tpu_custom_call.1} parent=1 // pred_fallthru
      _
    %v40 = vlaneseq
    %v41 = vshrl.u32 %v40, 7
    %v42 = vadd.s32 %v41, 8
    %v43 = vadd.s32 %v41, 16
    %v44 = vadd.s32 %v41, 24
    %v45 = vld [vmem:[#allocation5] sm:$0x1]
    %v46 = vperm.slane %v45, 0
    %vm47 = vcmp.eq.s32.totalorder %v41, %v46
    %vm48 = vcmp.eq.s32.totalorder %v42, %v46
    %vm49 = vcmp.eq.s32.totalorder %v43, %v46
    %vm50 = vcmp.eq.s32.totalorder %v44, %v46
    %v51 = vsel %vm47, 1, 0
    %v52 = vsel %vm48, 1, 0
    %v53 = vsel %vm49, 1, 0
    %v54 = vsel %vm50, 1, 0
    %v55 = vcvt.s32.f32 %v51
    %v56 = vcvt.s32.f32 %v52
    %v57 = vcvt.s32.f32 %v53
    %v58 = vcvt.s32.f32 %v54
    %v59 = vld [vmem:[#allocation2] sm:$0xff]
    %vm60 = vcmask 261120
    %v62 = vsel %vm60, %v59, 0
    %64 = vmatpush.msra.mxu0 0.0
    %65 = vmatpush.msra.mxu0 0.0
    %66 = vmatpush.msra.mxu0 0.0
    %67 = vmatpush.msra.mxu0 0.0
    %68 = vmatpush.msra.mxu0 0.0
    %69 = vmatpush.msra.mxu0 0.0
    %70 = vmatpush.msra.mxu0 0.0
    %71 = vmatpush.msra.mxu0 0.0
    %72 = vmatpush.msra.mxu0 0.0
    %73 = vmatpush.msra.mxu0 0.0
    %74 = vmatpush.msra.mxu0 0.0
    %75 = vmatpush.msra.mxu0 0.0
    %v76 = vand.u32 %v58, 4294901760
    %77 = vmatpush.msra.mxu0 %v76
    %v78 = vand.u32 %v57, 4294901760
    %79 = vmatpush.msra.mxu0 %v78
    %v80 = vand.u32 %v56, 4294901760
    %81 = vmatpush.msra.mxu0 %v80
    %v82 = vand.u32 %v55, 4294901760
    %83 = vmatpush.msra.mxu0 %v82
    %v84 = vand.u32 %v62, 4294901760
    %v85 = vsub.f32 %v62, %v84
    %v86 = vand.u32 %v85, 4294901760
    %v87 = vsub.f32 %v85, %v86
    %v88 = vand.u32 %v87, 4294901760
    %89 = vmatmul.f32.gmra.mxu0 %v88
    %v90 = vpop.f32.mrf.mxu0
    %v91 = vadd.f32 0.0, %v90
    %92 = vdwg.mxu0
    %93 = vmatpush.msra.mxu0 0.0
    %94 = vmatpush.msra.mxu0 0.0
    %95 = vmatpush.msra.mxu0 0.0
    %96 = vmatpush.msra.mxu0 0.0
    %97 = vmatpush.msra.mxu0 0.0
    %98 = vmatpush.msra.mxu0 0.0
    %99 = vmatpush.msra.mxu0 0.0
    %100 = vmatpush.msra.mxu0 0.0
    %101 = vmatpush.msra.mxu0 0.0
    %102 = vmatpush.msra.mxu0 0.0
    %103 = vmatpush.msra.mxu0 0.0
    %104 = vmatpush.msra.mxu0 0.0
    %v105 = vand.u32 %v58, 4294901760
    %v106 = vsub.f32 %v58, %v105
    %v107 = vand.u32 %v106, 4294901760
    %v108 = vsub.f32 %v106, %v107
    %v109 = vand.u32 %v108, 4294901760
    %110 = vmatpush.msra.mxu0 %v109
    %v111 = vand.u32 %v57, 4294901760
    %v112 = vsub.f32 %v57, %v111
    %v113 = vand.u32 %v112, 4294901760
    %v114 = vsub.f32 %v112, %v113
    %v115 = vand.u32 %v114, 4294901760
    %116 = vmatpush.msra.mxu0 %v115
    %v117 = vand.u32 %v56, 4294901760
    %v118 = vsub.f32 %v56, %v117
    %v119 = vand.u32 %v118, 4294901760
    %v120 = vsub.f32 %v118, %v119
    %v121 = vand.u32 %v120, 4294901760
    %122 = vmatpush.msra.mxu0 %v121
    %v123 = vand.u32 %v55, 4294901760
    %v124 = vsub.f32 %v55, %v123
    %v125 = vand.u32 %v124, 4294901760
    %v126 = vsub.f32 %v124, %v125
    %v127 = vand.u32 %v126, 4294901760
    %128 = vmatpush.msra.mxu0 %v127
    %v129 = vand.u32 %v62, 4294901760
    %130 = vmatmul.f32.gmra.mxu0 %v129
    %v131 = vpop.f32.mrf.mxu0
    %v132 = vadd.f32 %v91, %v131
    %133 = vdwg.mxu0
    %134 = vmatpush.msra.mxu0 0.0
    %135 = vmatpush.msra.mxu0 0.0
    %136 = vmatpush.msra.mxu0 0.0
    %137 = vmatpush.msra.mxu0 0.0
    %138 = vmatpush.msra.mxu0 0.0
    %139 = vmatpush.msra.mxu0 0.0
    %140 = vmatpush.msra.mxu0 0.0
    %141 = vmatpush.msra.mxu0 0.0
    %142 = vmatpush.msra.mxu0 0.0
    %143 = vmatpush.msra.mxu0 0.0
    %144 = vmatpush.msra.mxu0 0.0
    %145 = vmatpush.msra.mxu0 0.0
    %v146 = vand.u32 %v58, 4294901760
    %v147 = vsub.f32 %v58, %v146
    %148 = vmatpush.msra.mxu0 %v147
    %v149 = vand.u32 %v57, 4294901760
    %v150 = vsub.f32 %v57, %v149
    %151 = vmatpush.msra.mxu0 %v150
    %v152 = vand.u32 %v56, 4294901760
    %v153 = vsub.f32 %v56, %v152
    %154 = vmatpush.msra.mxu0 %v153
    %v155 = vand.u32 %v55, 4294901760
    %v156 = vsub.f32 %v55, %v155
    %157 = vmatpush.msra.mxu0 %v156
    %v158 = vand.u32 %v62, 4294901760
    %v159 = vsub.f32 %v62, %v158
    %160 = vmatmul.f32.gmra.mxu0 %v159
    %v161 = vpop.f32.mrf.mxu0
    %v162 = vadd.f32 %v132, %v161
    %163 = vdwg.mxu0
    %164 = vmatpush.msra.mxu0 0.0
    %165 = vmatpush.msra.mxu0 0.0
    %166 = vmatpush.msra.mxu0 0.0
    %167 = vmatpush.msra.mxu0 0.0
    %168 = vmatpush.msra.mxu0 0.0
    %169 = vmatpush.msra.mxu0 0.0
    %170 = vmatpush.msra.mxu0 0.0
    %171 = vmatpush.msra.mxu0 0.0
    %172 = vmatpush.msra.mxu0 0.0
    %173 = vmatpush.msra.mxu0 0.0
    %174 = vmatpush.msra.mxu0 0.0
    %175 = vmatpush.msra.mxu0 0.0
    %v176 = vand.u32 %v58, 4294901760
    %177 = vmatpush.msra.mxu0 %v176
    %v178 = vand.u32 %v57, 4294901760
    %179 = vmatpush.msra.mxu0 %v178
    %v180 = vand.u32 %v56, 4294901760
    %181 = vmatpush.msra.mxu0 %v180
    %v182 = vand.u32 %v55, 4294901760
    %183 = vmatpush.msra.mxu0 %v182
    %v184 = vand.u32 %v62, 4294901760
    %v185 = vsub.f32 %v62, %v184
    %v186 = vand.u32 %v185, 4294901760
    %187 = vmatmul.f32.gmra.mxu0 %v186
    %v188 = vpop.f32.mrf.mxu0
    %v189 = vadd.f32 %v162, %v188
    %190 = vdwg.mxu0
    %191 = vmatpush.msra.mxu0 0.0
    %192 = vmatpush.msra.mxu0 0.0
    %193 = vmatpush.msra.mxu0 0.0
    %194 = vmatpush.msra.mxu0 0.0
    %195 = vmatpush.msra.mxu0 0.0
    %196 = vmatpush.msra.mxu0 0.0
    %197 = vmatpush.msra.mxu0 0.0
    %198 = vmatpush.msra.mxu0 0.0
    %199 = vmatpush.msra.mxu0 0.0
    %200 = vmatpush.msra.mxu0 0.0
    %201 = vmatpush.msra.mxu0 0.0
    %202 = vmatpush.msra.mxu0 0.0
    %v203 = vand.u32 %v58, 4294901760
    %v204 = vsub.f32 %v58, %v203
    %v205 = vand.u32 %v204, 4294901760
    %206 = vmatpush.msra.mxu0 %v205
    %v207 = vand.u32 %v57, 4294901760
    %v208 = vsub.f32 %v57, %v207
    %v209 = vand.u32 %v208, 4294901760
    %210 = vmatpush.msra.mxu0 %v209
    %v211 = vand.u32 %v56, 4294901760
    %v212 = vsub.f32 %v56, %v211
    %v213 = vand.u32 %v212, 4294901760
    %214 = vmatpush.msra.mxu0 %v213
    %v215 = vand.u32 %v55, 4294901760
    %v216 = vsub.f32 %v55, %v215
    %v217 = vand.u32 %v216, 4294901760
    %218 = vmatpush.msra.mxu0 %v217
    %v219 = vand.u32 %v62, 4294901760
    %220 = vmatmul.f32.gmra.mxu0 %v219
    %v221 = vpop.f32.mrf.mxu0
    %v222 = vadd.f32 %v189, %v221
    %223 = vdwg.mxu0
    %224 = vmatpush.msra.mxu0 0.0
    %225 = vmatpush.msra.mxu0 0.0
    %226 = vmatpush.msra.mxu0 0.0
    %227 = vmatpush.msra.mxu0 0.0
    %228 = vmatpush.msra.mxu0 0.0
    %229 = vmatpush.msra.mxu0 0.0
    %230 = vmatpush.msra.mxu0 0.0
    %231 = vmatpush.msra.mxu0 0.0
    %232 = vmatpush.msra.mxu0 0.0
    %233 = vmatpush.msra.mxu0 0.0
    %234 = vmatpush.msra.mxu0 0.0
    %235 = vmatpush.msra.mxu0 0.0
    %v236 = vand.u32 %v58, 4294901760
    %237 = vmatpush.msra.mxu0 %v236
    %v238 = vand.u32 %v57, 4294901760
    %239 = vmatpush.msra.mxu0 %v238
    %v240 = vand.u32 %v56, 4294901760
    %241 = vmatpush.msra.mxu0 %v240
    %v242 = vand.u32 %v55, 4294901760
    %243 = vmatpush.msra.mxu0 %v242
    %v244 = vand.u32 %v62, 4294901760
    %245 = vmatmul.f32.gmra.mxu0 %v244
    %v246 = vpop.f32.mrf.mxu0
    %v247 = vadd.f32 %v222, %v246
    %248 = vdwg.mxu0
    %249 = vst [vmem:[#allocation7] sm:$0xff] %v247
    // Predicated region
    $region18: #{tpu_custom_call.1} parent=1 // pred_check
      _
    $region19: #{tpu_custom_call.1} parent=1 // pred_check_branch
      %251 = sbr.rel (0) target = $region21
    $region20: #{tpu_custom_call.1} parent=1 // pred_region
      %253 = vsyncadd [#allocation4], 0
      %s255 = sshll.u32 [#allocation7], 4
      %s256 = int_to_ptr.vmem [resolvable:$true] %s255
      %s257 = sshll.u32 %s2, 4
      %s258 = int_to_ptr.hbm [resolvable:$true] %s257
      %260 = dma.vmem_to_hbm [thread:$0]  %s256, 128, %s258, [#allocation4]
    $region21: #{tpu_custom_call.1} parent=1 // pred_fallthru
      _
    // Predicated region
    $region22: #{tpu_custom_call.1} parent=1 // pred_check
      _
    $region23: #{tpu_custom_call.1} parent=1 // pred_check_branch
      %262 = sbr.rel (0) target = $region25
    $region24: #{tpu_custom_call.1} parent=1 // pred_region
      %264 = dma.done [#allocation4], 128
    $region25: #{tpu_custom_call.1} parent=1 // pred_fallthru
      _
    %265 = vsyncpa [#allocation3], 1
    %266 = vsyncpa [#allocation6], 1
    %267 = vsyncpa [#allocation4], 1

</llo_original>
